<compile_context>
chip_gen: v6e
topology: v6e:2x2x1
jax: 0.10.0
libtpu: 0.0.40
codegen_flags: <defaults>
</compile_context>

<pallas_src>
import functools

import jax
import jax.numpy as jnp
import numpy as np
from jax.experimental import pallas as pl
from jax.experimental.pallas import tpu as pltpu

EPSILON = 1.1      # module default epsilon
LN_EPS = 1e-15     # LayerNorm eps from ScalarEncoder.__init__


def _round_up(x, m):
    return (x + m - 1) // m * m


def _mse_kernel(x_ref, m_ref, params_ref, out_ref, *, epsilon):
    """Fused scale weights + per-scale affine + LayerNorm + weighted sum.

    Lane-packed layout: each L(=128)-lane row holds G = L // H original scalar
    rows, each occupying its own H-lane group.

      x_ref      : (TNp, L)      f32  x pre-replicated across each H-lane group
      m_ref      : (L, L)        f32  block-diagonal ones/H (segmented-mean matmul)
      params_ref : (5, S, 1, L)  f32  [w, k*b, ln_gamma, ln_beta, 1/scales],
                                      each (S, H) param tiled G times along lanes
      out_ref    : (TNp, L)      f32  packed output (G rows of H per 128 lanes)
    """
    S = params_ref.shape[1]
    TNp, L = x_ref.shape

    xp = x_ref[...]                                  # (TNp, L)
    x3 = xp[None, :, :]                              # (1, TNp, L)

    w = params_ref[0]                                # (S, 1, L)
    kb = params_ref[1]                               # (S, 1, L)   == k * b (precomputed)
    gamma = params_ref[2]                            # (S, 1, L)
    beta = params_ref[3]                             # (S, 1, L)
    inv_s = params_ref[4]                            # (S, 1, L)   == 1 / scales

    # ---- scale weights alpha, lane-dense (log / reciprocal hit full vregs) ----
    a = jnp.abs(x3) * inv_s                          # (S, TNp, L)
    alpha = jnp.abs(pl.reciprocal(jnp.log(a + epsilon), approx=True))
    alpha = alpha * pl.reciprocal(jnp.sum(alpha, axis=0, keepdims=True), approx=True)

    # ---- per-scale affine + LayerNorm (segmented per H-lane group) ----
    z = x3 * w + kb                                  # (S, TNp, L)

    m = m_ref[...]                                   # (L, L) block-diag ones/H

    def group_mean(t):
        # Per-H-lane-group mean, broadcast back across the group (MXU matmul).
        return jnp.dot(t.reshape(S * TNp, L), m,
                       preferred_element_type=jnp.float32).reshape(S, TNp, L)

    mu = group_mean(z)
    c = z - mu
    var = group_mean(c * c)                          # biased variance (matches LayerNorm)
    y = c * jax.lax.rsqrt(var + LN_EPS)              # rsqrt on the EUP slot
    y = y * gamma + beta                             # (S, TNp, L)

    # weighted sum over the scale (slab) axis -- plain cross-slab adds, full-lane store
    out_ref[...] = jnp.sum(alpha * y, axis=0).astype(out_ref.dtype)


def prepare_params(scales, w, b, gamma, beta):
    """Parameter-only precompute (depends only on parameters -> cache across calls)."""
    S, H = w.shape
    scales = jnp.asarray(scales, jnp.float32)
    # Rows packed per 128-lane row; falls back to 1 (lane width H) if H doesn't tile 128.
    G = (128 // H) if (H <= 128 and 128 % H == 0) else 1
    L = G * H

    def lane_tile(p):
        return jnp.tile(jnp.asarray(p, jnp.float32).reshape(S, H), (1, G))   # (S, L)

    params = jnp.stack(
        [lane_tile(w),
         lane_tile(scales[:, None] * jnp.asarray(b, jnp.float32)),           # k * b
         lane_tile(gamma),
         lane_tile(beta),
         lane_tile(jnp.broadcast_to((1.0 / scales)[:, None], (S, H)))],      # 1 / k
        axis=0,
    ).reshape(5, S, 1, L)

    groups = np.arange(L) // H
    ln_mat = jnp.asarray((groups[:, None] == groups[None, :]).astype(np.float32) / H)

    return {"params": params, "ln_mat": ln_mat, "hidden_dim": H, "group": G}


def _xla_forward(x, prepared, epsilon):
    """Plain-XLA path for tiny batches (launch/step overhead dominates)."""
    params = prepared["params"]
    H = prepared["hidden_dim"]
    w = params[0, :, 0, :H]
    kb = params[1, :, 0, :H]
    gamma = params[2, :, 0, :H]
    beta = params[3, :, 0, :H]
    inv_s = params[4, :, 0, 0]                               # (S,)
    a = jnp.abs(x) * inv_s[None, :]                          # (N, S)
    alpha = jnp.abs(1.0 / jnp.log(a + epsilon))
    alpha = alpha / jnp.sum(alpha, axis=-1, keepdims=True)
    z = x[:, None, :] * w[None] + kb[None]                   # (N, S, H)
    mu = jnp.mean(z, axis=-1, keepdims=True)
    var = jnp.mean((z - mu) ** 2, axis=-1, keepdims=True)
    y = (z - mu) * jax.lax.rsqrt(var + LN_EPS) * gamma[None] + beta[None]
    return jnp.sum(alpha[..., None] * y, axis=1)


def multi_scaled_scalar_encoder(x, prepared, epsilon=EPSILON, block_rows=256,
                                xla_fallback_rows=0):
    """x: (N, 1) f32. `prepared` from prepare_params(). Returns (N, H) f32."""
    params = prepared["params"]
    ln_mat = prepared["ln_mat"]
    H = prepared["hidden_dim"]
    G = prepared["group"]
    _, S, _, L = params.shape
    N = x.shape[0]
    x = x.astype(jnp.float32).reshape(N, 1)

    if N < xla_fallback_rows:
        return _xla_forward(x, prepared, epsilon)

    # --- wrapper-side lane packing: G original rows per L-lane row ---
    np_min = pl.cdiv(N, G)
    # Target >=4 tiles (2 per TensorCore on v7x); tnp % 8 == 0 ((8,128) rule).
    # block_rows=256 keeps the live (S, tnp, L) f32 temporaries well inside
    # v7x's 32 MiB scoped VMEM default (no vmem_limit override needed).
    tnp = min(block_rows, max(8, _round_up(pl.cdiv(np_min, 4), 8)))
    np_rows = _round_up(np_min, tnp)
    n_pad = np_rows * G
    # Padded rows are zeros: log(0 + eps) is finite, math is strictly per-row,
    # padded outputs are sliced away below.
    x_pad = jnp.pad(x, ((0, n_pad - N), (0, 0)))
    x_packed = jnp.broadcast_to(x_pad, (n_pad, H)).reshape(np_rows, L)

    grid = (np_rows // tnp,)
    kernel = functools.partial(_mse_kernel, epsilon=float(epsilon))

    cost = pl.CostEstimate(
        flops=int(4 * S * np_rows * L * L + 12 * S * np_rows * L),
        transcendentals=int(3 * S * np_rows * L),
        bytes_accessed=int(4 * (2 * np_rows * L + 5 * S * L + L * L)),
    )

    out_packed = pl.pallas_call(
        kernel,
        out_shape=jax.ShapeDtypeStruct((np_rows, L), jnp.float32),
        grid=grid,
        in_specs=[
            pl.BlockSpec((tnp, L), lambda i: (i, 0)),              # packed x, tiled over rows
            pl.BlockSpec((L, L), lambda i: (0, 0)),                # block-diag ones/H, resident
            pl.BlockSpec((5, S, 1, L), lambda i: (0, 0, 0, 0)),    # fused param slab, resident
        ],
        out_specs=pl.BlockSpec((tnp, L), lambda i: (i, 0)),
        compiler_params=pltpu.CompilerParams(
            dimension_semantics=("parallel",),   # row tiles shard across TCs on v7x
        ),
        cost_estimate=cost,
    )(x_packed, ln_mat, params)

    return out_packed.reshape(n_pad, H)[:N]


if __name__ == "__main__":
    # Deterministic parameter / input construction (matches module __init__ shapes).
    scales_list = [1e-4, 1e-3, 1e-2, 1e-1, 1.0, 1e1, 1e2, 1e3, 1e4]
    S = len(scales_list)
    H = 32      # hidden_dim
    N = 16      # batch of scalars

    key = jax.random.PRNGKey(0)
    k_x, k_w, k_b = jax.random.split(key, 3)
    x = (jax.random.uniform(k_x, (N, 1), jnp.float32) - 0.5) * 20.0
    w = jax.random.uniform(k_w, (S, H), jnp.float32)        # torch.rand -> U[0,1)
    b = jax.random.uniform(k_b, (S, H), jnp.float32)        # torch.rand -> U[0,1)
    gamma = jnp.ones((S, H), jnp.float32)                   # LayerNorm default weight
    beta = jnp.zeros((S, H), jnp.float32)                   # LayerNorm default bias
    scales = jnp.asarray(scales_list, jnp.float32)

    prepared = prepare_params(scales, w, b, gamma, beta)
    out = jax.block_until_ready(multi_scaled_scalar_encoder(x, prepared))

    # Pure-JAX reference (mirrors the PyTorch forward exactly).
    def reference(x):
        alpha = jnp.abs(1.0 / jnp.log(jnp.abs(x) @ (1.0 / scales).reshape(1, -1) + EPSILON))
        alpha = alpha / jnp.sum(alpha, axis=-1, keepdims=True)
        ys = []
        for s in range(S):
            z = x * w[s][None, :] + scales[s] * b[s][None, :]
            mean = jnp.mean(z, axis=-1, keepdims=True)
            var = jnp.mean((z - mean) ** 2, axis=-1, keepdims=True)
            ys.append((z - mean) / jnp.sqrt(var + LN_EPS) * gamma[s] + beta[s])
        y = jnp.stack(ys, axis=-2)                           # (N, S, H)
        return jnp.sum(y * alpha[..., None], axis=-2)        # (N, H)

    ref = jax.block_until_ready(reference(x))
    # approx=True reciprocals (EUP) carry ~2^-12 relative error in alpha -> 2e-3 tolerance.
    np.testing.assert_allclose(np.asarray(out), np.asarray(ref), rtol=2e-3, atol=2e-3)
    print("KERNEL_OK")
</pallas_src>

<mosaic_0001>
module attributes {stable_mosaic.version = 11 : i64} {
  func.func @_mse_kernel(%arg0: i32, %arg1: memref<8x128xf32, #tpu.memory_space<vmem>>, %arg2: memref<128x128xf32, #tpu.memory_space<vmem>>, %arg3: memref<5x9x1x128xf32, #tpu.memory_space<vmem>>, %arg4: memref<8x128xf32, #tpu.memory_space<vmem>>) attributes {dimension_semantics = [#tpu.dimension_semantics<parallel>], iteration_bounds = array<i64: 1>, scalar_prefetch = 0 : i64, scratch_operands = 0 : i64, tpu.core_type = #tpu.core_type<tc>, window_params = [{transform_indices = @transform_0, window_bounds = array<i64: 8, 128>}, {pipeline_mode = #tpu.pipeline_mode<synchronous>, transform_indices = @transform_1, window_bounds = array<i64: 128, 128>}, {pipeline_mode = #tpu.pipeline_mode<synchronous>, transform_indices = @transform_2, window_bounds = array<i64: 5, 9, 1, 128>}, {transform_indices = @transform_3, window_bounds = array<i64: 8, 128>}]} {
    %c0 = arith.constant 0 : index
    %c0_0 = arith.constant 0 : index
    %0 = vector.load %arg1[%c0, %c0_0] : memref<8x128xf32, #tpu.memory_space<vmem>>, vector<8x128xf32>
    %1 = vector.shape_cast %0 : vector<8x128xf32> to vector<1x8x128xf32>
    %c0_1 = arith.constant 0 : index
    %c0_2 = arith.constant 0 : index
    %c0_3 = arith.constant 0 : index
    %c0_4 = arith.constant 0 : index
    %2 = vector.load %arg3[%c0_1, %c0_2, %c0_3, %c0_4] : memref<5x9x1x128xf32, #tpu.memory_space<vmem>>, vector<1x9x1x128xf32>
    %3 = vector.shape_cast %2 : vector<1x9x1x128xf32> to vector<9x1x128xf32>
    %c1 = arith.constant 1 : index
    %c0_5 = arith.constant 0 : index
    %c0_6 = arith.constant 0 : index
    %c0_7 = arith.constant 0 : index
    %4 = vector.load %arg3[%c1, %c0_5, %c0_6, %c0_7] : memref<5x9x1x128xf32, #tpu.memory_space<vmem>>, vector<1x9x1x128xf32>
    %5 = vector.shape_cast %4 : vector<1x9x1x128xf32> to vector<9x1x128xf32>
    %c2 = arith.constant 2 : index
    %c0_8 = arith.constant 0 : index
    %c0_9 = arith.constant 0 : index
    %c0_10 = arith.constant 0 : index
    %6 = vector.load %arg3[%c2, %c0_8, %c0_9, %c0_10] : memref<5x9x1x128xf32, #tpu.memory_space<vmem>>, vector<1x9x1x128xf32>
    %7 = vector.shape_cast %6 : vector<1x9x1x128xf32> to vector<9x1x128xf32>
    %c3 = arith.constant 3 : index
    %c0_11 = arith.constant 0 : index
    %c0_12 = arith.constant 0 : index
    %c0_13 = arith.constant 0 : index
    %8 = vector.load %arg3[%c3, %c0_11, %c0_12, %c0_13] : memref<5x9x1x128xf32, #tpu.memory_space<vmem>>, vector<1x9x1x128xf32>
    %9 = vector.shape_cast %8 : vector<1x9x1x128xf32> to vector<9x1x128xf32>
    %c4 = arith.constant 4 : index
    %c0_14 = arith.constant 0 : index
    %c0_15 = arith.constant 0 : index
    %c0_16 = arith.constant 0 : index
    %10 = vector.load %arg3[%c4, %c0_14, %c0_15, %c0_16] : memref<5x9x1x128xf32, #tpu.memory_space<vmem>>, vector<1x9x1x128xf32>
    %11 = vector.shape_cast %10 : vector<1x9x1x128xf32> to vector<9x1x128xf32>
    %12 = math.absf %1 : vector<1x8x128xf32>
    %13 = vector.broadcast %12 : vector<1x8x128xf32> to vector<9x8x128xf32>
    %14 = vector.broadcast %11 : vector<9x1x128xf32> to vector<9x8x128xf32>
    %15 = arith.mulf %13, %14 : vector<9x8x128xf32>
    %cst = arith.constant 1.100000e+00 : f32
    %16 = vector.broadcast %cst : f32 to vector<9x8x128xf32>
    %17 = arith.addf %15, %16 : vector<9x8x128xf32>
    %18 = math.log %17 : vector<9x8x128xf32>
    %19 = tpu.reciprocal %18 {approx = true} : vector<9x8x128xf32> -> vector<9x8x128xf32>
    %20 = math.absf %19 : vector<9x8x128xf32>
    %cst_17 = arith.constant dense<0.000000e+00> : vector<8x128xf32>
    %21 = vector.multi_reduction <add>, %20, %cst_17 [0] : vector<9x8x128xf32> to vector<8x128xf32>
    %22 = vector.shape_cast %21 : vector<8x128xf32> to vector<1x8x128xf32>
    %23 = tpu.reciprocal %22 {approx = true} : vector<1x8x128xf32> -> vector<1x8x128xf32>
    %24 = vector.broadcast %23 : vector<1x8x128xf32> to vector<9x8x128xf32>
    %25 = arith.mulf %20, %24 : vector<9x8x128xf32>
    %26 = vector.broadcast %1 : vector<1x8x128xf32> to vector<9x8x128xf32>
    %27 = vector.broadcast %3 : vector<9x1x128xf32> to vector<9x8x128xf32>
    %28 = arith.mulf %26, %27 : vector<9x8x128xf32>
    %29 = vector.broadcast %5 : vector<9x1x128xf32> to vector<9x8x128xf32>
    %30 = arith.addf %28, %29 : vector<9x8x128xf32>
    %c0_18 = arith.constant 0 : index
    %c0_19 = arith.constant 0 : index
    %31 = vector.load %arg2[%c0_18, %c0_19] : memref<128x128xf32, #tpu.memory_space<vmem>>, vector<128x128xf32>
    %32 = vector.shape_cast %30 : vector<9x8x128xf32> to vector<72x128xf32>
    %cst_20 = arith.constant dense<0.000000e+00> : vector<72x128xf32>
    %33 = tpu.matmul %32, %31, %cst_20 {dimension_numbers = #tpu.dot_dimension_numbers<[1], [0], [0], [1], [0, 0, 1, 1], [], []>} : vector<72x128xf32>, vector<128x128xf32>, vector<72x128xf32> -> vector<72x128xf32>
    %34 = vector.shape_cast %33 : vector<72x128xf32> to vector<9x8x128xf32>
    %35 = arith.subf %30, %34 : vector<9x8x128xf32>
    %36 = arith.mulf %35, %35 : vector<9x8x128xf32>
    %37 = vector.shape_cast %36 : vector<9x8x128xf32> to vector<72x128xf32>
    %cst_21 = arith.constant dense<0.000000e+00> : vector<72x128xf32>
    %38 = tpu.matmul %37, %31, %cst_21 {dimension_numbers = #tpu.dot_dimension_numbers<[1], [0], [0], [1], [0, 0, 1, 1], [], []>} : vector<72x128xf32>, vector<128x128xf32>, vector<72x128xf32> -> vector<72x128xf32>
    %39 = vector.shape_cast %38 : vector<72x128xf32> to vector<9x8x128xf32>
    %cst_22 = arith.constant 1.000000e-15 : f32
    %40 = vector.broadcast %cst_22 : f32 to vector<9x8x128xf32>
    %41 = arith.addf %39, %40 : vector<9x8x128xf32>
    %42 = math.rsqrt %41 : vector<9x8x128xf32>
    %43 = arith.mulf %35, %42 : vector<9x8x128xf32>
    %44 = vector.broadcast %7 : vector<9x1x128xf32> to vector<9x8x128xf32>
    %45 = arith.mulf %43, %44 : vector<9x8x128xf32>
    %46 = vector.broadcast %9 : vector<9x1x128xf32> to vector<9x8x128xf32>
    %47 = arith.addf %45, %46 : vector<9x8x128xf32>
    %48 = arith.mulf %25, %47 : vector<9x8x128xf32>
    %cst_23 = arith.constant dense<0.000000e+00> : vector<8x128xf32>
    %49 = vector.multi_reduction <add>, %48, %cst_23 [0] : vector<9x8x128xf32> to vector<8x128xf32>
    %c0_24 = arith.constant 0 : index
    %c0_25 = arith.constant 0 : index
    %50 = vector.load %arg4[%c0_24, %c0_25] : memref<8x128xf32, #tpu.memory_space<vmem>>, vector<8x128xf32>
    tpu.vector_store %arg4[%c0_24, %c0_25], %49 {strides = array<i32>} : memref<8x128xf32, #tpu.memory_space<vmem>>, vector<8x128xf32>,
    return
  }
  func.func @transform_0(%arg0: i32) -> (i32, i32) {
    %c0_i32 = arith.constant 0 : i32
    %c0_i32_0 = arith.constant 0 : i32
    return %arg0, %c0_i32 : i32, i32
  }
  func.func @transform_1(%arg0: i32) -> (i32, i32) {
    %c0_i32 = arith.constant 0 : i32
    %c0_i32_0 = arith.constant 0 : i32
    %c0_i32_1 = arith.constant 0 : i32
    return %c0_i32, %c0_i32_0 : i32, i32
  }
  func.func @transform_2(%arg0: i32) -> (i32, i32, i32, i32) {
    %c0_i32 = arith.constant 0 : i32
    %c0_i32_0 = arith.constant 0 : i32
    %c0_i32_1 = arith.constant 0 : i32
    %c0_i32_2 = arith.constant 0 : i32
    %c0_i32_3 = arith.constant 0 : i32
    return %c0_i32, %c0_i32_0, %c0_i32_1, %c0_i32_2 : i32, i32, i32, i32
  }
  func.func @transform_3(%arg0: i32) -> (i32, i32) {
    %c0_i32 = arith.constant 0 : i32
    %c0_i32_0 = arith.constant 0 : i32
    return %arg0, %c0_i32 : i32, i32
  }
}

</mosaic_0001>

<llo_original>
// kernel: tpu_custom_call.1
$region0: #{tpu_custom_call.1}
  #allocation0 [shape = 'u32[]', space=smem, size = 0x4, offset = 0x4, fixed_abs, tag = 'smem constant byte address 0x4 - core index']
  #allocation1 [shape = 'u32[144,128]{1,0:T(1,128)}', space=vmem, size = 0x12000, scoped, tag = 'internal scratch']
  %s0 = inlined_call_operand.hbm [shape: f32[8,128], index: 0, kind: input, shape index: {}]
  %s1 = inlined_call_operand.hbm [shape: f32[128,128], index: 1, kind: input, shape index: {}]
  %s2 = inlined_call_operand.hbm [shape: f32[5,9,1,128], index: 2, kind: input, shape index: {}]
  %s3 = inlined_call_operand.hbm [shape: f32[8,128], index: 3, kind: output, shape index: {}]
  %s4 = sld [smem:[#allocation0]]
  $region34: #{tpu_custom_call.1} parent=0
    _
  %s6 = ssub.s32 1, %s4
  %s7 = scalar_select 0, %s6, %s4
  $region1: #{tpu_custom_call.1} parent=0
    #allocation2 [shape = 'u8[4096]{0}', space=vmem, size = 0x1000, scoped, tag = 'input window, operand 0, single buffered']
    #allocation3 [shape = 's32[1]{0}', space=sflag, size = 0x4, scoped, tag = 'scoped memory for tpu_custom_call.1']
    #allocation4 [shape = 's32[1]{0}', space=sflag, size = 0x4, scoped, tag = 'scoped memory for tpu_custom_call.1']
    #allocation5 [shape = 'u8[65536]{0}', space=vmem, size = 0x10000, scoped, tag = 'input window, operand 1, single buffered']
    #allocation6 [shape = 's32[1]{0}', space=sflag, size = 0x4, scoped, tag = 'scoped memory for tpu_custom_call.1']
    #allocation7 [shape = 'u8[23040]{0}', space=vmem, size = 0x5c00, scoped, tag = 'input window, operand 2, single buffered']
    #allocation8 [shape = 'u8[4096]{0}', space=vmem, size = 0x1000, scoped, tag = 'output window, operand 0, single buffered']
    %8 = vsyncpa [#allocation3], 0
    %9 = vsyncpa [#allocation6], 0
    %10 = vsyncpa [#allocation4], 0
    // Predicated region
    $region2: #{tpu_custom_call.1} parent=1 // pred_check
      _
    $region3: #{tpu_custom_call.1} parent=1 // pred_check_branch
      %12 = sbr.rel (0) target = $region5
    $region4: #{tpu_custom_call.1} parent=1 // pred_region
      %s14 = ssub.s32 128, 128
      %15 = vsyncadd [#allocation3], %s14
      %s17 = sshll.u32 [#allocation2], 4
      %s18 = int_to_ptr.vmem [resolvable:$true] %s17
      %20 = dma.hbm_to_vmem [thread:$0]  %s0, 128, %s18, [#allocation3]
    $region5: #{tpu_custom_call.1} parent=1 // pred_fallthru
      _
    // Predicated region
    $region6: #{tpu_custom_call.1} parent=1 // pred_check
      _
    $region7: #{tpu_custom_call.1} parent=1 // pred_check_branch
      %22 = sbr.rel (0) target = $region9
    $region8: #{tpu_custom_call.1} parent=1 // pred_region
      %s24 = ssub.s32 2048, 2048
      %25 = vsyncadd [#allocation6], %s24
      %s26 = sshll.u32 [#allocation5], 4
      %s27 = int_to_ptr.vmem [resolvable:$true] %s26
      %32 = dma.hbm_to_vmem [thread:$0]  %s1, 2048, %s27, [#allocation6], 128, 128, 8
    $region9: #{tpu_custom_call.1} parent=1 // pred_fallthru
      _
    // Predicated region
    $region10: #{tpu_custom_call.1} parent=1 // pred_check
      _
    $region11: #{tpu_custom_call.1} parent=1 // pred_check_branch
      %34 = sbr.rel (0) target = $region13
    $region12: #{tpu_custom_call.1} parent=1 // pred_region
      %s36 = ssub.s32 720, 720
      %37 = vsyncadd [#allocation6], %s36
      %s38 = sshll.u32 [#allocation7], 4
      %s39 = int_to_ptr.vmem [resolvable:$true] %s38
      %44 = dma.hbm_to_vmem [thread:$0]  %s2, 720, %s39, [#allocation6], 16, 16, 1
    $region13: #{tpu_custom_call.1} parent=1 // pred_fallthru
      _
    // Predicated region
    $region14: #{tpu_custom_call.1} parent=1 // pred_check
      _
    $region15: #{tpu_custom_call.1} parent=1 // pred_check_branch
      %46 = sbr.rel (0) target = $region17
    $region16: #{tpu_custom_call.1} parent=1 // pred_region
      %47 = dma.done [#allocation3], 128
    $region17: #{tpu_custom_call.1} parent=1 // pred_fallthru
      _
    // Predicated region
    $region18: #{tpu_custom_call.1} parent=1 // pred_check
      _
    $region19: #{tpu_custom_call.1} parent=1 // pred_check_branch
      %49 = sbr.rel (0) target = $region21
    $region20: #{tpu_custom_call.1} parent=1 // pred_region
      %50 = dma.done [#allocation6], 2048
    $region21: #{tpu_custom_call.1} parent=1 // pred_fallthru
      _
    // Predicated region
    $region22: #{tpu_custom_call.1} parent=1 // pred_check
      _
    $region23: #{tpu_custom_call.1} parent=1 // pred_check_branch
      %52 = sbr.rel (0) target = $region25
    $region24: #{tpu_custom_call.1} parent=1 // pred_region
      %53 = dma.done [#allocation6], 720
    $region25: #{tpu_custom_call.1} parent=1 // pred_fallthru
      _
    %v54 = vld [vmem:[#allocation2] sm:$0xff]
    %v55 = vld [vmem:[#allocation7] sm:$0x1]
    %v56 = vld [vmem:[#allocation7 + $0x1] sm:$0x1]
    %v57 = vld [vmem:[#allocation7 + $0x2] sm:$0x1]
    %v58 = vld [vmem:[#allocation7 + $0x3] sm:$0x1]
    %v59 = vld [vmem:[#allocation7 + $0x4] sm:$0x1]
    %v60 = vld [vmem:[#allocation7 + $0x5] sm:$0x1]
    %v61 = vld [vmem:[#allocation7 + $0x6] sm:$0x1]
    %v62 = vld [vmem:[#allocation7 + $0x7] sm:$0x1]
    %v63 = vld [vmem:[#allocation7 + $0x8] sm:$0x1]
    %s64 = scalar_lea.vmem [#allocation7], 9
    %v65 = vld [vmem:[%s64] sm:$0x1]
    %v66 = vld [vmem:[%s64 + $0x1] sm:$0x1]
    %v67 = vld [vmem:[%s64 + $0x2] sm:$0x1]
    %v68 = vld [vmem:[%s64 + $0x3] sm:$0x1]
    %v69 = vld [vmem:[%s64 + $0x4] sm:$0x1]
    %v70 = vld [vmem:[%s64 + $0x5] sm:$0x1]
    %v71 = vld [vmem:[%s64 + $0x6] sm:$0x1]
    %v72 = vld [vmem:[%s64 + $0x7] sm:$0x1]
    %v73 = vld [vmem:[%s64 + $0x8] sm:$0x1]
    %s74 = scalar_lea.vmem [#allocation7], 18
    %v75 = vld [vmem:[%s74] sm:$0x1]
    %v76 = vld [vmem:[%s74 + $0x1] sm:$0x1]
    %v77 = vld [vmem:[%s74 + $0x2] sm:$0x1]
    %v78 = vld [vmem:[%s74 + $0x3] sm:$0x1]
    %v79 = vld [vmem:[%s74 + $0x4] sm:$0x1]
    %v80 = vld [vmem:[%s74 + $0x5] sm:$0x1]
    %v81 = vld [vmem:[%s74 + $0x6] sm:$0x1]
    %v82 = vld [vmem:[%s74 + $0x7] sm:$0x1]
    %v83 = vld [vmem:[%s74 + $0x8] sm:$0x1]
    %s84 = scalar_lea.vmem [#allocation7], 27
    %v85 = vld [vmem:[%s84] sm:$0x1]
    %v86 = vld [vmem:[%s84 + $0x1] sm:$0x1]
    %v87 = vld [vmem:[%s84 + $0x2] sm:$0x1]
    %v88 = vld [vmem:[%s84 + $0x3] sm:$0x1]
    %v89 = vld [vmem:[%s84 + $0x4] sm:$0x1]
    %v90 = vld [vmem:[%s84 + $0x5] sm:$0x1]
    %v91 = vld [vmem:[%s84 + $0x6] sm:$0x1]
    %v92 = vld [vmem:[%s84 + $0x7] sm:$0x1]
    %v93 = vld [vmem:[%s84 + $0x8] sm:$0x1]
    %s94 = scalar_lea.vmem [#allocation7], 36
    %v95 = vld [vmem:[%s94] sm:$0x1]
    %v96 = vld [vmem:[%s94 + $0x1] sm:$0x1]
    %v97 = vld [vmem:[%s94 + $0x2] sm:$0x1]
    %v98 = vld [vmem:[%s94 + $0x3] sm:$0x1]
    %v99 = vld [vmem:[%s94 + $0x4] sm:$0x1]
    %v100 = vld [vmem:[%s94 + $0x5] sm:$0x1]
    %v101 = vld [vmem:[%s94 + $0x6] sm:$0x1]
    %v102 = vld [vmem:[%s94 + $0x7] sm:$0x1]
    %v103 = vld [vmem:[%s94 + $0x8] sm:$0x1]
    %v104 = vand.u32 2147483647, %v54
    %v114 = vlaneseq
    %v115 = vshrl.u32 %v114, 7
    %v116 = vsub.s32 0, %v115
    %v117 = vrot.slane %v95, %v116
    %v118 = vlaneseq
    %v119 = vshrl.u32 %v118, 7
    %v120 = vsub.s32 0, %v119
    %v121 = vrot.slane %v96, %v120
    %v122 = vlaneseq
    %v123 = vshrl.u32 %v122, 7
    %v124 = vsub.s32 0, %v123
    %v125 = vrot.slane %v97, %v124
    %v126 = vlaneseq
    %v127 = vshrl.u32 %v126, 7
    %v128 = vsub.s32 0, %v127
    %v129 = vrot.slane %v98, %v128
    %v130 = vlaneseq
    %v131 = vshrl.u32 %v130, 7
    %v132 = vsub.s32 0, %v131
    %v133 = vrot.slane %v99, %v132
    %v134 = vlaneseq
    %v135 = vshrl.u32 %v134, 7
    %v136 = vsub.s32 0, %v135
    %v137 = vrot.slane %v100, %v136
    %v138 = vlaneseq
    %v139 = vshrl.u32 %v138, 7
    %v140 = vsub.s32 0, %v139
    %v141 = vrot.slane %v101, %v140
    %v142 = vlaneseq
    %v143 = vshrl.u32 %v142, 7
    %v144 = vsub.s32 0, %v143
    %v145 = vrot.slane %v102, %v144
    %v146 = vlaneseq
    %v147 = vshrl.u32 %v146, 7
    %v148 = vsub.s32 0, %v147
    %v149 = vrot.slane %v103, %v148
    %v159 = vmul.f32 %v104, %v117
    %v160 = vmul.f32 %v104, %v121
    %v161 = vmul.f32 %v104, %v125
    %v162 = vmul.f32 %v104, %v129
    %v163 = vmul.f32 %v104, %v133
    %v164 = vmul.f32 %v104, %v137
    %v165 = vmul.f32 %v104, %v141
    %v166 = vmul.f32 %v104, %v145
    %v167 = vmul.f32 %v104, %v149
    %v168 = vadd.f32 %v159, 1.1
    %v169 = vadd.f32 %v160, 1.1
    %v170 = vadd.f32 %v161, 1.1
    %v171 = vadd.f32 %v162, 1.1
    %v172 = vadd.f32 %v163, 1.1
    %v173 = vadd.f32 %v164, 1.1
    %v174 = vadd.f32 %v165, 1.1
    %v175 = vadd.f32 %v166, 1.1
    %v176 = vadd.f32 %v167, 1.1
    %v177 = vlog2.pop %v168
    %v178 = vmul.f32 %v177, 0.6931472
    %v179 = vlog2.pop %v169
    %v180 = vmul.f32 %v179, 0.6931472
    %v181 = vlog2.pop %v170
    %v182 = vmul.f32 %v181, 0.6931472
    %v183 = vlog2.pop %v171
    %v184 = vmul.f32 %v183, 0.6931472
    %v185 = vlog2.pop %v172
    %v186 = vmul.f32 %v185, 0.6931472
    %v187 = vlog2.pop %v173
    %v188 = vmul.f32 %v187, 0.6931472
    %v189 = vlog2.pop %v174
    %v190 = vmul.f32 %v189, 0.6931472
    %v191 = vlog2.pop %v175
    %v192 = vmul.f32 %v191, 0.6931472
    %v193 = vlog2.pop %v176
    %v194 = vmul.f32 %v193, 0.6931472
    %v195 = vrcp.pop %v178
    %v196 = vrcp.pop %v180
    %v197 = vrcp.pop %v182
    %v198 = vrcp.pop %v184
    %v199 = vrcp.pop %v186
    %v200 = vrcp.pop %v188
    %v201 = vrcp.pop %v190
    %v202 = vrcp.pop %v192
    %v203 = vrcp.pop %v194
    %v204 = vand.u32 2147483647, %v195
    %v205 = vand.u32 2147483647, %v196
    %v206 = vand.u32 2147483647, %v197
    %v207 = vand.u32 2147483647, %v198
    %v208 = vand.u32 2147483647, %v199
    %v209 = vand.u32 2147483647, %v200
    %v210 = vand.u32 2147483647, %v201
    %v211 = vand.u32 2147483647, %v202
    %v212 = vand.u32 2147483647, %v203
    %v213 = vadd.f32 %v204, %v205
    %v214 = vadd.f32 %v213, %v206
    %v215 = vadd.f32 %v214, %v207
    %v216 = vadd.f32 %v215, %v208
    %v217 = vadd.f32 %v216, %v209
    %v218 = vadd.f32 %v217, %v210
    %v219 = vadd.f32 %v218, %v211
    %v220 = vadd.f32 %v219, %v212
    %v221 = vrcp.pop %v220
    %v222 = vmul.f32 %v204, %v221
    %v223 = vmul.f32 %v205, %v221
    %v224 = vmul.f32 %v206, %v221
    %v225 = vmul.f32 %v207, %v221
    %v226 = vmul.f32 %v208, %v221
    %v227 = vmul.f32 %v209, %v221
    %v228 = vmul.f32 %v210, %v221
    %v229 = vmul.f32 %v211, %v221
    %v230 = vmul.f32 %v212, %v221
    %v240 = vlaneseq
    %v241 = vshrl.u32 %v240, 7
    %v242 = vsub.s32 0, %v241
    %v243 = vrot.slane %v55, %v242
    %v244 = vlaneseq
    %v245 = vshrl.u32 %v244, 7
    %v246 = vsub.s32 0, %v245
    %v247 = vrot.slane %v56, %v246
    %v248 = vlaneseq
    %v249 = vshrl.u32 %v248, 7
    %v250 = vsub.s32 0, %v249
    %v251 = vrot.slane %v57, %v250
    %v252 = vlaneseq
    %v253 = vshrl.u32 %v252, 7
    %v254 = vsub.s32 0, %v253
    %v255 = vrot.slane %v58, %v254
    %v256 = vlaneseq
    %v257 = vshrl.u32 %v256, 7
    %v258 = vsub.s32 0, %v257
    %v259 = vrot.slane %v59, %v258
    %v260 = vlaneseq
    %v261 = vshrl.u32 %v260, 7
    %v262 = vsub.s32 0, %v261
    %v263 = vrot.slane %v60, %v262
    %v264 = vlaneseq
    %v265 = vshrl.u32 %v264, 7
    %v266 = vsub.s32 0, %v265
    %v267 = vrot.slane %v61, %v266
    %v268 = vlaneseq
    %v269 = vshrl.u32 %v268, 7
    %v270 = vsub.s32 0, %v269
    %v271 = vrot.slane %v62, %v270
    %v272 = vlaneseq
    %v273 = vshrl.u32 %v272, 7
    %v274 = vsub.s32 0, %v273
    %v275 = vrot.slane %v63, %v274
    %v285 = vmul.f32 %v54, %v243
    %v286 = vmul.f32 %v54, %v247
    %v287 = vmul.f32 %v54, %v251
    %v288 = vmul.f32 %v54, %v255
    %v289 = vmul.f32 %v54, %v259
    %v290 = vmul.f32 %v54, %v263
    %v291 = vmul.f32 %v54, %v267
    %v292 = vmul.f32 %v54, %v271
    %v293 = vmul.f32 %v54, %v275
    %v303 = vlaneseq
    %v304 = vshrl.u32 %v303, 7
    %v305 = vsub.s32 0, %v304
    %v306 = vrot.slane %v65, %v305
    %v307 = vlaneseq
    %v308 = vshrl.u32 %v307, 7
    %v309 = vsub.s32 0, %v308
    %v310 = vrot.slane %v66, %v309
    %v311 = vlaneseq
    %v312 = vshrl.u32 %v311, 7
    %v313 = vsub.s32 0, %v312
    %v314 = vrot.slane %v67, %v313
    %v315 = vlaneseq
    %v316 = vshrl.u32 %v315, 7
    %v317 = vsub.s32 0, %v316
    %v318 = vrot.slane %v68, %v317
    %v319 = vlaneseq
    %v320 = vshrl.u32 %v319, 7
    %v321 = vsub.s32 0, %v320
    %v322 = vrot.slane %v69, %v321
    %v323 = vlaneseq
    %v324 = vshrl.u32 %v323, 7
    %v325 = vsub.s32 0, %v324
    %v326 = vrot.slane %v70, %v325
    %v327 = vlaneseq
    %v328 = vshrl.u32 %v327, 7
    %v329 = vsub.s32 0, %v328
    %v330 = vrot.slane %v71, %v329
    %v331 = vlaneseq
    %v332 = vshrl.u32 %v331, 7
    %v333 = vsub.s32 0, %v332
    %v334 = vrot.slane %v72, %v333
    %v335 = vlaneseq
    %v336 = vshrl.u32 %v335, 7
    %v337 = vsub.s32 0, %v336
    %v338 = vrot.slane %v73, %v337
    %v348 = vadd.f32 %v285, %v306
    %v349 = vadd.f32 %v286, %v310
    %v350 = vadd.f32 %v287, %v314
    %v351 = vadd.f32 %v288, %v318
    %v352 = vadd.f32 %v289, %v322
    %v353 = vadd.f32 %v290, %v326
    %v354 = vadd.f32 %v291, %v330
    %v355 = vadd.f32 %v292, %v334
    %v356 = vadd.f32 %v293, %v338
    %v357 = vld [vmem:[#allocation5] sm:$0xff]
    %v358 = vld [vmem:[#allocation5 + $0x8] sm:$0xff]
    %v359 = vld [vmem:[#allocation5 + $0x10] sm:$0xff]
    %v360 = vld [vmem:[#allocation5 + $0x18] sm:$0xff]
    %v361 = vld [vmem:[#allocation5 + $0x20] sm:$0xff]
    %v362 = vld [vmem:[#allocation5 + $0x28] sm:$0xff]
    %v363 = vld [vmem:[#allocation5 + $0x30] sm:$0xff]
    %v364 = vld [vmem:[#allocation5 + $0x38] sm:$0xff]
    %v365 = vld [vmem:[#allocation5 + $0x40] sm:$0xff]
    %v366 = vld [vmem:[#allocation5 + $0x48] sm:$0xff]
    %v367 = vld [vmem:[#allocation5 + $0x50] sm:$0xff]
    %v368 = vld [vmem:[#allocation5 + $0x58] sm:$0xff]
    %v369 = vld [vmem:[#allocation5 + $0x60] sm:$0xff]
    %v370 = vld [vmem:[#allocation5 + $0x68] sm:$0xff]
    %v371 = vld [vmem:[#allocation5 + $0x70] sm:$0xff]
    %v372 = vld [vmem:[#allocation5 + $0x78] sm:$0xff]
    %373 = vmatprep.subr.mxu0 0.0
    %374 = vmatpush1.msra.mxu0 %v372
    %375 = vmatprep.subr.mxu0 0.0
    %376 = vmatpush1.msra.mxu0 %v371
    %377 = vmatprep.subr.mxu0 0.0
    %378 = vmatpush1.msra.mxu0 %v370
    %379 = vmatprep.subr.mxu0 0.0
    %380 = vmatpush1.msra.mxu0 %v369
    %381 = vmatprep.subr.mxu0 0.0
    %382 = vmatpush1.msra.mxu0 %v368
    %383 = vmatprep.subr.mxu0 0.0
    %384 = vmatpush1.msra.mxu0 %v367
    %385 = vmatprep.subr.mxu0 0.0
    %386 = vmatpush1.msra.mxu0 %v366
    %387 = vmatprep.subr.mxu0 0.0
    %388 = vmatpush1.msra.mxu0 %v365
    %389 = vmatprep.subr.mxu0 0.0
    %390 = vmatpush1.msra.mxu0 %v364
    %391 = vmatprep.subr.mxu0 0.0
    %392 = vmatpush1.msra.mxu0 %v363
    %393 = vmatprep.subr.mxu0 0.0
    %394 = vmatpush1.msra.mxu0 %v362
    %395 = vmatprep.subr.mxu0 0.0
    %396 = vmatpush1.msra.mxu0 %v361
    %397 = vmatprep.subr.mxu0 0.0
    %398 = vmatpush1.msra.mxu0 %v360
    %399 = vmatprep.subr.mxu0 0.0
    %400 = vmatpush1.msra.mxu0 %v359
    %401 = vmatprep.subr.mxu0 0.0
    %402 = vmatpush1.msra.mxu0 %v358
    %403 = vmatprep.subr.mxu0 0.0
    %404 = vmatpush1.msra.mxu0 %v357
    %405 = vmatprep.subr.mxu0 0.0
    %406 = vmatpush2.msra.mxu0 0.0
    %407 = vmatprep.subr.mxu0 0.0
    %408 = vmatpush2.msra.mxu0 0.0
    %409 = vmatprep.subr.mxu0 0.0
    %410 = vmatpush2.msra.mxu0 0.0
    %411 = vmatprep.subr.mxu0 0.0
    %412 = vmatpush2.msra.mxu0 0.0
    %413 = vmatprep.subr.mxu0 0.0
    %414 = vmatpush2.msra.mxu0 0.0
    %415 = vmatprep.subr.mxu0 0.0
    %416 = vmatpush2.msra.mxu0 0.0
    %417 = vmatprep.subr.mxu0 0.0
    %418 = vmatpush2.msra.mxu0 0.0
    %419 = vmatprep.subr.mxu0 0.0
    %420 = vmatpush2.msra.mxu0 0.0
    %421 = vmatprep.subr.mxu0 0.0
    %422 = vmatpush2.msra.mxu0 0.0
    %423 = vmatprep.subr.mxu0 0.0
    %424 = vmatpush2.msra.mxu0 0.0
    %425 = vmatprep.subr.mxu0 0.0
    %426 = vmatpush2.msra.mxu0 0.0
    %427 = vmatprep.subr.mxu0 0.0
    %428 = vmatpush2.msra.mxu0 0.0
    %429 = vmatprep.subr.mxu0 0.0
    %430 = vmatpush2.msra.mxu0 0.0
    %431 = vmatprep.subr.mxu0 0.0
    %432 = vmatpush2.msra.mxu0 0.0
    %433 = vmatprep.subr.mxu0 0.0
    %434 = vmatpush2.msra.mxu0 0.0
    %435 = vmatprep.subr.mxu0 0.0
    %436 = vmatpush2.msra.mxu0 0.0
    %437 = vmatprep.mubr.f32.mxu0 0.0
    %438 = vmatmul.mubr.f32.gmra.mxu0 %v348
    %v439 = vpop.f32.mrf.mxu0
    %v440 = vadd.f32 0.0, %v439
    %v441 = vpop.f32.mrf.mxu0
    %442 = vmatprep.mubr.f32.mxu0 0.0
    %443 = vmatmul.mubr.f32.gmra.mxu0 %v349
    %v444 = vpop.f32.mrf.mxu0
    %v445 = vadd.f32 0.0, %v444
    %v446 = vpop.f32.mrf.mxu0
    %447 = vmatprep.mubr.f32.mxu0 0.0
    %448 = vmatmul.mubr.f32.gmra.mxu0 %v350
    %v449 = vpop.f32.mrf.mxu0
    %v450 = vadd.f32 0.0, %v449
    %v451 = vpop.f32.mrf.mxu0
    %452 = vmatprep.mubr.f32.mxu0 0.0
    %453 = vmatmul.mubr.f32.gmra.mxu0 %v351
    %v454 = vpop.f32.mrf.mxu0
    %v455 = vadd.f32 0.0, %v454
    %v456 = vpop.f32.mrf.mxu0
    %457 = vmatprep.mubr.f32.mxu0 0.0
    %458 = vmatmul.mubr.f32.gmra.mxu0 %v352
    %v459 = vpop.f32.mrf.mxu0
    %v460 = vadd.f32 0.0, %v459
    %v461 = vpop.f32.mrf.mxu0
    %462 = vmatprep.mubr.f32.mxu0 0.0
    %463 = vmatmul.mubr.f32.gmra.mxu0 %v353
    %v464 = vpop.f32.mrf.mxu0
    %v465 = vadd.f32 0.0, %v464
    %v466 = vpop.f32.mrf.mxu0
    %467 = vmatprep.mubr.f32.mxu0 0.0
    %468 = vmatmul.mubr.f32.gmra.mxu0 %v354
    %v469 = vpop.f32.mrf.mxu0
    %v470 = vadd.f32 0.0, %v469
    %v471 = vpop.f32.mrf.mxu0
    %472 = vmatprep.mubr.f32.mxu0 0.0
    %473 = vmatmul.mubr.f32.gmra.mxu0 %v355
    %v474 = vpop.f32.mrf.mxu0
    %v475 = vadd.f32 0.0, %v474
    %v476 = vpop.f32.mrf.mxu0
    %477 = vmatprep.mubr.f32.mxu0 0.0
    %478 = vmatmul.mubr.f32.gmra.mxu0 %v356
    %v479 = vpop.f32.mrf.mxu0
    %v480 = vadd.f32 0.0, %v479
    %v481 = vpop.f32.mrf.mxu0
    %482 = vdwg.mxu0
    %v483 = vsub.f32 %v348, %v440
    %v484 = vsub.f32 %v349, %v445
    %v485 = vsub.f32 %v350, %v450
    %v486 = vsub.f32 %v351, %v455
    %v487 = vsub.f32 %v352, %v460
    %v488 = vsub.f32 %v353, %v465
    %v489 = vsub.f32 %v354, %v470
    %v490 = vsub.f32 %v355, %v475
    %v491 = vsub.f32 %v356, %v480
    %v492 = vmul.f32 %v483, %v483
    %v493 = vmul.f32 %v484, %v484
    %v494 = vmul.f32 %v485, %v485
    %v495 = vmul.f32 %v486, %v486
    %v496 = vmul.f32 %v487, %v487
    %v497 = vmul.f32 %v488, %v488
    %v498 = vmul.f32 %v489, %v489
    %v499 = vmul.f32 %v490, %v490
    %v500 = vmul.f32 %v491, %v491
    %501 = vmatprep.subr.mxu0 0.0
    %502 = vmatpush1.msra.mxu0 %v372
    %503 = vmatprep.subr.mxu0 0.0
    %504 = vmatpush1.msra.mxu0 %v371
    %505 = vmatprep.subr.mxu0 0.0
    %506 = vmatpush1.msra.mxu0 %v370
    %507 = vmatprep.subr.mxu0 0.0
    %508 = vmatpush1.msra.mxu0 %v369
    %509 = vmatprep.subr.mxu0 0.0
    %510 = vmatpush1.msra.mxu0 %v368
    %511 = vmatprep.subr.mxu0 0.0
    %512 = vmatpush1.msra.mxu0 %v367
    %513 = vmatprep.subr.mxu0 0.0
    %514 = vmatpush1.msra.mxu0 %v366
    %515 = vmatprep.subr.mxu0 0.0
    %516 = vmatpush1.msra.mxu0 %v365
    %517 = vmatprep.subr.mxu0 0.0
    %518 = vmatpush1.msra.mxu0 %v364
    %519 = vmatprep.subr.mxu0 0.0
    %520 = vmatpush1.msra.mxu0 %v363
    %521 = vmatprep.subr.mxu0 0.0
    %522 = vmatpush1.msra.mxu0 %v362
    %523 = vmatprep.subr.mxu0 0.0
    %524 = vmatpush1.msra.mxu0 %v361
    %525 = vmatprep.subr.mxu0 0.0
    %526 = vmatpush1.msra.mxu0 %v360
    %527 = vmatprep.subr.mxu0 0.0
    %528 = vmatpush1.msra.mxu0 %v359
    %529 = vmatprep.subr.mxu0 0.0
    %530 = vmatpush1.msra.mxu0 %v358
    %531 = vmatprep.subr.mxu0 0.0
    %532 = vmatpush1.msra.mxu0 %v357
    %533 = vmatprep.subr.mxu0 0.0
    %534 = vmatpush2.msra.mxu0 0.0
    %535 = vmatprep.subr.mxu0 0.0
    %536 = vmatpush2.msra.mxu0 0.0
    %537 = vmatprep.subr.mxu0 0.0
    %538 = vmatpush2.msra.mxu0 0.0
    %539 = vmatprep.subr.mxu0 0.0
    %540 = vmatpush2.msra.mxu0 0.0
    %541 = vmatprep.subr.mxu0 0.0
    %542 = vmatpush2.msra.mxu0 0.0
    %543 = vmatprep.subr.mxu0 0.0
    %544 = vmatpush2.msra.mxu0 0.0
    %545 = vmatprep.subr.mxu0 0.0
    %546 = vmatpush2.msra.mxu0 0.0
    %547 = vmatprep.subr.mxu0 0.0
    %548 = vmatpush2.msra.mxu0 0.0
    %549 = vmatprep.subr.mxu0 0.0
    %550 = vmatpush2.msra.mxu0 0.0
    %551 = vmatprep.subr.mxu0 0.0
    %552 = vmatpush2.msra.mxu0 0.0
    %553 = vmatprep.subr.mxu0 0.0
    %554 = vmatpush2.msra.mxu0 0.0
    %555 = vmatprep.subr.mxu0 0.0
    %556 = vmatpush2.msra.mxu0 0.0
    %557 = vmatprep.subr.mxu0 0.0
    %558 = vmatpush2.msra.mxu0 0.0
    %559 = vmatprep.subr.mxu0 0.0
    %560 = vmatpush2.msra.mxu0 0.0
    %561 = vmatprep.subr.mxu0 0.0
    %562 = vmatpush2.msra.mxu0 0.0
    %563 = vmatprep.subr.mxu0 0.0
    %564 = vmatpush2.msra.mxu0 0.0
    %565 = vmatprep.mubr.f32.mxu0 0.0
    %566 = vmatmul.mubr.f32.gmra.mxu0 %v492
    %v567 = vpop.f32.mrf.mxu0
    %v568 = vadd.f32 0.0, %v567
    %v569 = vpop.f32.mrf.mxu0
    %570 = vmatprep.mubr.f32.mxu0 0.0
    %571 = vmatmul.mubr.f32.gmra.mxu0 %v493
    %v572 = vpop.f32.mrf.mxu0
    %v573 = vadd.f32 0.0, %v572
    %v574 = vpop.f32.mrf.mxu0
    %575 = vmatprep.mubr.f32.mxu0 0.0
    %576 = vmatmul.mubr.f32.gmra.mxu0 %v494
    %v577 = vpop.f32.mrf.mxu0
    %v578 = vadd.f32 0.0, %v577
    %v579 = vpop.f32.mrf.mxu0
    %580 = vmatprep.mubr.f32.mxu0 0.0
    %581 = vmatmul.mubr.f32.gmra.mxu0 %v495
    %v582 = vpop.f32.mrf.mxu0
    %v583 = vadd.f32 0.0, %v582
    %v584 = vpop.f32.mrf.mxu0
    %585 = vmatprep.mubr.f32.mxu0 0.0
    %586 = vmatmul.mubr.f32.gmra.mxu0 %v496
    %v587 = vpop.f32.mrf.mxu0
    %v588 = vadd.f32 0.0, %v587
    %v589 = vpop.f32.mrf.mxu0
    %590 = vmatprep.mubr.f32.mxu0 0.0
    %591 = vmatmul.mubr.f32.gmra.mxu0 %v497
    %v592 = vpop.f32.mrf.mxu0
    %v593 = vadd.f32 0.0, %v592
    %v594 = vpop.f32.mrf.mxu0
    %595 = vmatprep.mubr.f32.mxu0 0.0
    %596 = vmatmul.mubr.f32.gmra.mxu0 %v498
    %v597 = vpop.f32.mrf.mxu0
    %v598 = vadd.f32 0.0, %v597
    %v599 = vpop.f32.mrf.mxu0
    %600 = vmatprep.mubr.f32.mxu0 0.0
    %601 = vmatmul.mubr.f32.gmra.mxu0 %v499
    %v602 = vpop.f32.mrf.mxu0
    %v603 = vadd.f32 0.0, %v602
    %v604 = vpop.f32.mrf.mxu0
    %605 = vmatprep.mubr.f32.mxu0 0.0
    %606 = vmatmul.mubr.f32.gmra.mxu0 %v500
    %v607 = vpop.f32.mrf.mxu0
    %v608 = vadd.f32 0.0, %v607
    %v609 = vpop.f32.mrf.mxu0
    %610 = vdwg.mxu0
    %v611 = vadd.f32 %v568, 1e-15
    %v612 = vadd.f32 %v573, 1e-15
    %v613 = vadd.f32 %v578, 1e-15
    %v614 = vadd.f32 %v583, 1e-15
    %v615 = vadd.f32 %v588, 1e-15
    %v616 = vadd.f32 %v593, 1e-15
    %v617 = vadd.f32 %v598, 1e-15
    %v618 = vadd.f32 %v603, 1e-15
    %v619 = vadd.f32 %v608, 1e-15
    %v620 = vrsqrt.pop %v611
    %v621 = vrsqrt.pop %v612
    %v622 = vrsqrt.pop %v613
    %v623 = vrsqrt.pop %v614
    %v624 = vrsqrt.pop %v615
    %v625 = vrsqrt.pop %v616
    %v626 = vrsqrt.pop %v617
    %v627 = vrsqrt.pop %v618
    %v628 = vrsqrt.pop %v619
    %v629 = vmul.f32 %v483, %v620
    %v630 = vmul.f32 %v484, %v621
    %v631 = vmul.f32 %v485, %v622
    %v632 = vmul.f32 %v486, %v623
    %v633 = vmul.f32 %v487, %v624
    %v634 = vmul.f32 %v488, %v625
    %v635 = vmul.f32 %v489, %v626
    %v636 = vmul.f32 %v490, %v627
    %v637 = vmul.f32 %v491, %v628
    %v647 = vlaneseq
    %v648 = vshrl.u32 %v647, 7
    %v649 = vsub.s32 0, %v648
    %v650 = vrot.slane %v75, %v649
    %v651 = vlaneseq
    %v652 = vshrl.u32 %v651, 7
    %v653 = vsub.s32 0, %v652
    %v654 = vrot.slane %v76, %v653
    %v655 = vlaneseq
    %v656 = vshrl.u32 %v655, 7
    %v657 = vsub.s32 0, %v656
    %v658 = vrot.slane %v77, %v657
    %v659 = vlaneseq
    %v660 = vshrl.u32 %v659, 7
    %v661 = vsub.s32 0, %v660
    %v662 = vrot.slane %v78, %v661
    %v663 = vlaneseq
    %v664 = vshrl.u32 %v663, 7
    %v665 = vsub.s32 0, %v664
    %v666 = vrot.slane %v79, %v665
    %v667 = vlaneseq
    %v668 = vshrl.u32 %v667, 7
    %v669 = vsub.s32 0, %v668
    %v670 = vrot.slane %v80, %v669
    %v671 = vlaneseq
    %v672 = vshrl.u32 %v671, 7
    %v673 = vsub.s32 0, %v672
    %v674 = vrot.slane %v81, %v673
    %v675 = vlaneseq
    %v676 = vshrl.u32 %v675, 7
    %v677 = vsub.s32 0, %v676
    %v678 = vrot.slane %v82, %v677
    %v679 = vlaneseq
    %v680 = vshrl.u32 %v679, 7
    %v681 = vsub.s32 0, %v680
    %v682 = vrot.slane %v83, %v681
    %v692 = vmul.f32 %v629, %v650
    %v693 = vmul.f32 %v630, %v654
    %v694 = vmul.f32 %v631, %v658
    %v695 = vmul.f32 %v632, %v662
    %v696 = vmul.f32 %v633, %v666
    %v697 = vmul.f32 %v634, %v670
    %v698 = vmul.f32 %v635, %v674
    %v699 = vmul.f32 %v636, %v678
    %v700 = vmul.f32 %v637, %v682
    %v710 = vlaneseq
    %v711 = vshrl.u32 %v710, 7
    %v712 = vsub.s32 0, %v711
    %v713 = vrot.slane %v85, %v712
    %v714 = vlaneseq
    %v715 = vshrl.u32 %v714, 7
    %v716 = vsub.s32 0, %v715
    %v717 = vrot.slane %v86, %v716
    %v718 = vlaneseq
    %v719 = vshrl.u32 %v718, 7
    %v720 = vsub.s32 0, %v719
    %v721 = vrot.slane %v87, %v720
    %v722 = vlaneseq
    %v723 = vshrl.u32 %v722, 7
    %v724 = vsub.s32 0, %v723
    %v725 = vrot.slane %v88, %v724
    %v726 = vlaneseq
    %v727 = vshrl.u32 %v726, 7
    %v728 = vsub.s32 0, %v727
    %v729 = vrot.slane %v89, %v728
    %v730 = vlaneseq
    %v731 = vshrl.u32 %v730, 7
    %v732 = vsub.s32 0, %v731
    %v733 = vrot.slane %v90, %v732
    %v734 = vlaneseq
    %v735 = vshrl.u32 %v734, 7
    %v736 = vsub.s32 0, %v735
    %v737 = vrot.slane %v91, %v736
    %v738 = vlaneseq
    %v739 = vshrl.u32 %v738, 7
    %v740 = vsub.s32 0, %v739
    %v741 = vrot.slane %v92, %v740
    %v742 = vlaneseq
    %v743 = vshrl.u32 %v742, 7
    %v744 = vsub.s32 0, %v743
    %v745 = vrot.slane %v93, %v744
    %v755 = vadd.f32 %v692, %v713
    %v756 = vadd.f32 %v693, %v717
    %v757 = vadd.f32 %v694, %v721
    %v758 = vadd.f32 %v695, %v725
    %v759 = vadd.f32 %v696, %v729
    %v760 = vadd.f32 %v697, %v733
    %v761 = vadd.f32 %v698, %v737
    %v762 = vadd.f32 %v699, %v741
    %v763 = vadd.f32 %v700, %v745
    %v764 = vmul.f32 %v222, %v755
    %v765 = vmul.f32 %v223, %v756
    %v766 = vmul.f32 %v224, %v757
    %v767 = vmul.f32 %v225, %v758
    %v768 = vmul.f32 %v226, %v759
    %v769 = vmul.f32 %v227, %v760
    %v770 = vmul.f32 %v228, %v761
    %v771 = vmul.f32 %v229, %v762
    %v772 = vmul.f32 %v230, %v763
    %v773 = vadd.f32 %v764, %v765
    %v774 = vadd.f32 %v773, %v766
    %v775 = vadd.f32 %v774, %v767
    %v776 = vadd.f32 %v775, %v768
    %v777 = vadd.f32 %v776, %v769
    %v778 = vadd.f32 %v777, %v770
    %v779 = vadd.f32 %v778, %v771
    %v780 = vadd.f32 %v779, %v772
    %781 = vst [vmem:[#allocation8] sm:$0xff] %v780
    // Predicated region
    $region26: #{tpu_custom_call.1} parent=1 // pred_check
      _
    $region27: #{tpu_custom_call.1} parent=1 // pred_check_branch
      %783 = sbr.rel (0) target = $region29
    $region28: #{tpu_custom_call.1} parent=1 // pred_region
      %s785 = ssub.s32 128, 128
      %786 = vsyncadd [#allocation4], %s785
      %s788 = sshll.u32 [#allocation8], 4
      %s789 = int_to_ptr.vmem [resolvable:$true] %s788
      %791 = dma.vmem_to_hbm [thread:$0]  %s789, 128, %s3, [#allocation4]
    $region29: #{tpu_custom_call.1} parent=1 // pred_fallthru
      _
    // Predicated region
    $region30: #{tpu_custom_call.1} parent=1 // pred_check
      _
    $region31: #{tpu_custom_call.1} parent=1 // pred_check_branch
      %793 = sbr.rel (0) target = $region33
    $region32: #{tpu_custom_call.1} parent=1 // pred_region
      %794 = dma.done [#allocation4], 128
    $region33: #{tpu_custom_call.1} parent=1 // pred_fallthru
      _
    %795 = vsyncpa [#allocation3], 1
    %796 = vsyncpa [#allocation6], 1
    %797 = vsyncpa [#allocation4], 1

</llo_original>
